<compile_context>
chip_gen: v7x
topology: tpu7x:2x2x1
jax: 0.10.0
libtpu: 0.0.40
codegen_flags: <defaults>
</compile_context>

<pallas_src>
import functools

import jax
import jax.numpy as jnp
from jax.experimental import pallas as pl
from jax.experimental.pallas import tpu as pltpu


def _softplus(x):
    # Numerically stable softplus (== jax.nn.softplus / nn.Softplus beta=1).
    # TODO(synk): perf review suggested moving log1p onto the VALU via a short
    # polynomial; roofline says the >=degree-7 poly needed for 1e-6 accuracy
    # makes the VALU the new bottleneck (no f32 FMA on v5e/v6e), so the exact
    # EUP form is kept.  Revisit only with a bundle dump showing EUP slack.
    return jnp.maximum(x, 0.0) + jnp.log1p(jnp.exp(-jnp.abs(x)))


def pinn_kernel(x_ref,
                w0_ref, b0_ref,
                w1_ref, b1_ref,
                w2_ref, b2_ref,
                w3_ref, b3_ref,
                o_ref):
    # x_ref: (d_in, block_b) — batch on lanes.  Weights are (out, in) as in
    # PyTorch; biases are (out, 1) columns that broadcast over batch lanes.
    x = x_ref[...]

    # fc_inp + Tanh                        -> (h1, block_b)
    h = jnp.dot(w0_ref[...], x, preferred_element_type=jnp.float32) + b0_ref[...]
    h = jnp.tanh(h)

    # hl1 + Softplus                       -> (h1, block_b)
    h = jnp.dot(w1_ref[...], h, preferred_element_type=jnp.float32) + b1_ref[...]
    h = _softplus(h)

    # hl_edge + Softplus                   -> (h_edge, block_b)
    h = jnp.dot(w2_ref[...], h, preferred_element_type=jnp.float32) + b2_ref[...]
    h = _softplus(h)

    # fc_out (no activation)               -> (d_out, block_b)
    out = jnp.dot(w3_ref[...], h, preferred_element_type=jnp.float32) + b3_ref[...]
    o_ref[...] = out.astype(o_ref.dtype)


_BLOCK_B_CAP = 16384   # lanes per grid step (raised from 2048 per perf review)


def _tensorcores_per_chip():
    """Best-effort TensorCore count per chip (v7x: 2; v5e/v6e: 1)."""
    try:
        info = pltpu.get_tpu_info()
        for name in ("num_cores", "core_count", "num_tensorcores",
                     "tensorcores_per_chip", "cores_per_chip"):
            v = getattr(info, name, None)
            if isinstance(v, int) and 0 < v <= 8:
                return v
    except Exception:
        pass
    try:
        if "v7" in jax.devices()[0].device_kind.lower():
            return 2
    except Exception:
        pass
    return 1


def _choose_block_b(batch, num_cores):
    """Lane tile over the batch.

    Single-TC chips (v5e/v6e): one block as wide as possible (<= cap); every
    extra grid step costs ~0.35us and there is no second core to feed.
    Multi-TC chips (v7x): split so there are >= num_cores "parallel" grid
    steps, keeping both TensorCores busy.
    """
    padded = 128 * pl.cdiv(max(batch, 1), 128)
    if num_cores > 1 and padded > 128:
        per_core = 128 * pl.cdiv(padded // num_cores, 128)
        return max(128, min(_BLOCK_B_CAP, per_core))
    # Largest 128-multiple not exceeding the batch (min 128), so the only
    # partial block is the usual boundary block.
    full = max(128, 128 * (batch // 128))
    return min(_BLOCK_B_CAP, full)


@functools.partial(jax.jit, static_argnames=("block_b",))
def pinn_forward_lanes(x_t, params, *, block_b=None):
    """Fast path: x_t is (input_dim, B) batch-on-lanes; returns (output_dim, B).

    Zero wrapper-side transposes/HBM passes — callers that keep activations in
    the (features, batch) layout pay only the kernel's own HBM traffic.
    """
    d_in, B = x_t.shape
    h1 = params["w0"].shape[0]
    he = params["w2"].shape[0]
    d_out = params["w3"].shape[0]
    if block_b is None:
        block_b = _choose_block_b(B, _tensorcores_per_chip())
    assert block_b % 128 == 0
    grid = (pl.cdiv(B, block_b),)

    def resident(shape):
        # Whole-array block with a constant index_map: stays resident in VMEM,
        # never re-DMA'd across grid steps (~7 KB total footprint).
        # TODO(synk): pipeline_mode=pl.Buffered(1) would drop the dead second
        # buffer; skipped — negligible win, nonzero lowering risk.
        zeros = (0,) * len(shape)
        return pl.BlockSpec(shape, lambda i, _z=zeros: _z)

    in_specs = [
        pl.BlockSpec((d_in, block_b), lambda i: (0, i)),   # x^T, tiled on lanes
        resident(params["w0"].shape), resident(params["b0"].shape),
        resident(params["w1"].shape), resident(params["b1"].shape),
        resident(params["w2"].shape), resident(params["b2"].shape),
        resident(params["w3"].shape), resident(params["b3"].shape),
    ]
    out_spec = pl.BlockSpec((d_out, block_b), lambda i: (0, i))

    # Advisory cost hint for XLA's scheduler around this tiny custom call.
    matmul_flops = 2 * B * (d_in * h1 + h1 * h1 + h1 * he + he * d_out)
    bias_flops = B * (h1 + h1 + he + d_out)
    transcendentals = B * (h1 + 2 * h1 + 2 * he)       # tanh + 2x(exp, log1p)
    param_bytes = sum(int(p.size) * 4 for p in params.values())
    cost = pl.CostEstimate(
        flops=int(matmul_flops + bias_flops),
        transcendentals=int(transcendentals),
        bytes_accessed=int(4 * B * (d_in + d_out) + param_bytes),
    )

    return pl.pallas_call(
        pinn_kernel,
        out_shape=jax.ShapeDtypeStruct((d_out, B), jnp.float32),
        grid_spec=pltpu.PrefetchScalarGridSpec(
            num_scalar_prefetch=0,
            grid=grid,
            in_specs=in_specs,
            out_specs=out_spec,
        ),
        compiler_params=pltpu.CompilerParams(
            # On v7x this single axis should shard across both TCs; grid step
            # count is chosen >= num_cores above so neither core idles.
            dimension_semantics=("parallel",),
        ),
        cost_estimate=cost,
    )(x_t,
      params["w0"], params["b0"],
      params["w1"], params["b1"],
      params["w2"], params["b2"],
      params["w3"], params["b3"])


@functools.partial(jax.jit, static_argnames=("block_b",))
def pinn_forward(x, params, *, block_b=None):
    """Drop-in (B, input_dim) -> (B, output_dim) API matching the nn.Module.

    Jitted so the two boundary transposes to/from the kernel's lane-dense
    (features, batch) layout are handled inside one XLA program; callers that
    can keep the lanes layout should use pinn_forward_lanes and skip them.
    """
    out_t = pinn_forward_lanes(x.T, params, block_b=block_b)
    return out_t.T


def init_params(key, input_dim, num_node_hlayer, num_node_edge, output_dim):
    """Deterministic nn.Linear-style init (uniform +-1/sqrt(fan_in)).

    Weights stored exactly like PyTorch: (out, in).  Biases as (out, 1).
    bias_TF and edge_bias (module globals) are assumed True here.
    """
    dims = [(num_node_hlayer, input_dim),
            (num_node_hlayer, num_node_hlayer),
            (num_node_edge, num_node_hlayer),
            (output_dim, num_node_edge)]
    params = {}
    for idx, (fan_out, fan_in) in enumerate(dims):
        key, kw, kb = jax.random.split(key, 3)
        bound = 1.0 / jnp.sqrt(float(fan_in))
        params[f"w{idx}"] = jax.random.uniform(
            kw, (fan_out, fan_in), jnp.float32, minval=-bound, maxval=bound)
        params[f"b{idx}"] = jax.random.uniform(
            kb, (fan_out, 1), jnp.float32, minval=-bound, maxval=bound)
    return params


def pinn_reference(x, params):
    h = jnp.tanh(x @ params["w0"].T + params["b0"].T)
    h = jax.nn.softplus(h @ params["w1"].T + params["b1"].T)
    h = jax.nn.softplus(h @ params["w2"].T + params["b2"].T)
    return h @ params["w3"].T + params["b3"].T


if __name__ == "__main__":
    # Small shapes consistent with the module's __init__ signature.
    input_dim = 4
    num_node_hlayer = 32
    num_node_edge = 16
    output_dim = 4
    batch = 128

    key = jax.random.PRNGKey(0)
    key, kx = jax.random.split(key)
    x = jax.random.normal(kx, (batch, input_dim), jnp.float32)
    params = init_params(key, input_dim, num_node_hlayer, num_node_edge, output_dim)

    # Drop-in (B, d) API.
    out = jax.block_until_ready(pinn_forward(x, params))
    ref = pinn_reference(x, params)
    assert out.shape == (batch, output_dim)
    assert jnp.allclose(out, ref, atol=1e-5, rtol=1e-5), "mismatch vs reference"

    # Fast batch-on-lanes path (no wrapper transposes).
    out_lanes = jax.block_until_ready(pinn_forward_lanes(x.T, params))
    assert out_lanes.shape == (output_dim, batch)
    assert jnp.allclose(out_lanes.T, ref, atol=1e-5, rtol=1e-5), "mismatch (lanes path)"

    # Arbitrary (non-128-multiple) batch: cdiv grid + pipelined boundary block.
    x2 = jax.random.normal(jax.random.PRNGKey(1), (200, input_dim), jnp.float32)
    out2 = jax.block_until_ready(pinn_forward(x2, params))
    ref2 = pinn_reference(x2, params)
    assert out2.shape == (200, output_dim)
    assert jnp.allclose(out2, ref2, atol=1e-5, rtol=1e-5), "mismatch vs reference (tail)"

    print("KERNEL_OK")
</pallas_src>

<mosaic_0001>
module attributes {stable_mosaic.version = 11 : i64} {
  func.func @pinn_kernel(%arg0: i32, %arg1: memref<4x128xf32, #tpu.memory_space<vmem>>, %arg2: memref<32x4xf32, #tpu.memory_space<vmem>>, %arg3: memref<32x1xf32, #tpu.memory_space<vmem>>, %arg4: memref<32x32xf32, #tpu.memory_space<vmem>>, %arg5: memref<32x1xf32, #tpu.memory_space<vmem>>, %arg6: memref<16x32xf32, #tpu.memory_space<vmem>>, %arg7: memref<16x1xf32, #tpu.memory_space<vmem>>, %arg8: memref<4x16xf32, #tpu.memory_space<vmem>>, %arg9: memref<4x1xf32, #tpu.memory_space<vmem>>, %arg10: memref<4x128xf32, #tpu.memory_space<vmem>>) attributes {dimension_semantics = [#tpu.dimension_semantics<parallel>], iteration_bounds = array<i64: 1>, scalar_prefetch = 0 : i64, scratch_operands = 0 : i64, tpu.core_type = #tpu.core_type<tc>, window_params = [{transform_indices = @transform_0, window_bounds = array<i64: 4, 128>}, {pipeline_mode = #tpu.pipeline_mode<synchronous>, transform_indices = @transform_1, window_bounds = array<i64: 32, 4>}, {pipeline_mode = #tpu.pipeline_mode<synchronous>, transform_indices = @transform_2, window_bounds = array<i64: 32, 1>}, {pipeline_mode = #tpu.pipeline_mode<synchronous>, transform_indices = @transform_3, window_bounds = array<i64: 32, 32>}, {pipeline_mode = #tpu.pipeline_mode<synchronous>, transform_indices = @transform_4, window_bounds = array<i64: 32, 1>}, {pipeline_mode = #tpu.pipeline_mode<synchronous>, transform_indices = @transform_5, window_bounds = array<i64: 16, 32>}, {pipeline_mode = #tpu.pipeline_mode<synchronous>, transform_indices = @transform_6, window_bounds = array<i64: 16, 1>}, {pipeline_mode = #tpu.pipeline_mode<synchronous>, transform_indices = @transform_7, window_bounds = array<i64: 4, 16>}, {pipeline_mode = #tpu.pipeline_mode<synchronous>, transform_indices = @transform_8, window_bounds = array<i64: 4, 1>}, {transform_indices = @transform_9, window_bounds = array<i64: 4, 128>}]} {
    %c0 = arith.constant 0 : index
    %c0_0 = arith.constant 0 : index
    %0 = vector.load %arg1[%c0, %c0_0] : memref<4x128xf32, #tpu.memory_space<vmem>>, vector<4x128xf32>
    %c0_1 = arith.constant 0 : index
    %c0_2 = arith.constant 0 : index
    %1 = vector.load %arg2[%c0_1, %c0_2] : memref<32x4xf32, #tpu.memory_space<vmem>>, vector<32x4xf32>
    %cst = arith.constant dense<0.000000e+00> : vector<32x128xf32>
    %2 = tpu.matmul %1, %0, %cst {dimension_numbers = #tpu.dot_dimension_numbers<[1], [0], [0], [1], [0, 0, 1, 1], [], []>} : vector<32x4xf32>, vector<4x128xf32>, vector<32x128xf32> -> vector<32x128xf32>
    %c0_3 = arith.constant 0 : index
    %c0_4 = arith.constant 0 : index
    %3 = vector.load %arg3[%c0_3, %c0_4] : memref<32x1xf32, #tpu.memory_space<vmem>>, vector<32x1xf32>
    %4 = vector.broadcast %3 : vector<32x1xf32> to vector<32x128xf32>
    %5 = arith.addf %2, %4 : vector<32x128xf32>
    %6 = math.tanh %5 : vector<32x128xf32>
    %c0_5 = arith.constant 0 : index
    %c0_6 = arith.constant 0 : index
    %7 = vector.load %arg4[%c0_5, %c0_6] : memref<32x32xf32, #tpu.memory_space<vmem>>, vector<32x32xf32>
    %cst_7 = arith.constant dense<0.000000e+00> : vector<32x128xf32>
    %8 = tpu.matmul %7, %6, %cst_7 {dimension_numbers = #tpu.dot_dimension_numbers<[1], [0], [0], [1], [0, 0, 1, 1], [], []>} : vector<32x32xf32>, vector<32x128xf32>, vector<32x128xf32> -> vector<32x128xf32>
    %c0_8 = arith.constant 0 : index
    %c0_9 = arith.constant 0 : index
    %9 = vector.load %arg5[%c0_8, %c0_9] : memref<32x1xf32, #tpu.memory_space<vmem>>, vector<32x1xf32>
    %10 = vector.broadcast %9 : vector<32x1xf32> to vector<32x128xf32>
    %11 = arith.addf %8, %10 : vector<32x128xf32>
    %cst_10 = arith.constant 0.000000e+00 : f32
    %12 = vector.broadcast %cst_10 : f32 to vector<32x128xf32>
    %13 = arith.maximumf %11, %12 : vector<32x128xf32>
    %14 = math.absf %11 : vector<32x128xf32>
    %cst_11 = arith.constant 0.000000e+00 : f32
    %15 = vector.broadcast %cst_11 : f32 to vector<32x128xf32>
    %16 = arith.subf %15, %14 : vector<32x128xf32>
    %17 = math.exp %16 : vector<32x128xf32>
    %18 = math.log1p %17 : vector<32x128xf32>
    %19 = arith.addf %13, %18 : vector<32x128xf32>
    %c0_12 = arith.constant 0 : index
    %c0_13 = arith.constant 0 : index
    %20 = vector.load %arg6[%c0_12, %c0_13] : memref<16x32xf32, #tpu.memory_space<vmem>>, vector<16x32xf32>
    %cst_14 = arith.constant dense<0.000000e+00> : vector<16x128xf32>
    %21 = tpu.matmul %20, %19, %cst_14 {dimension_numbers = #tpu.dot_dimension_numbers<[1], [0], [0], [1], [0, 0, 1, 1], [], []>} : vector<16x32xf32>, vector<32x128xf32>, vector<16x128xf32> -> vector<16x128xf32>
    %c0_15 = arith.constant 0 : index
    %c0_16 = arith.constant 0 : index
    %22 = vector.load %arg7[%c0_15, %c0_16] : memref<16x1xf32, #tpu.memory_space<vmem>>, vector<16x1xf32>
    %23 = vector.broadcast %22 : vector<16x1xf32> to vector<16x128xf32>
    %24 = arith.addf %21, %23 : vector<16x128xf32>
    %cst_17 = arith.constant 0.000000e+00 : f32
    %25 = vector.broadcast %cst_17 : f32 to vector<16x128xf32>
    %26 = arith.maximumf %24, %25 : vector<16x128xf32>
    %27 = math.absf %24 : vector<16x128xf32>
    %cst_18 = arith.constant 0.000000e+00 : f32
    %28 = vector.broadcast %cst_18 : f32 to vector<16x128xf32>
    %29 = arith.subf %28, %27 : vector<16x128xf32>
    %30 = math.exp %29 : vector<16x128xf32>
    %31 = math.log1p %30 : vector<16x128xf32>
    %32 = arith.addf %26, %31 : vector<16x128xf32>
    %c0_19 = arith.constant 0 : index
    %c0_20 = arith.constant 0 : index
    %33 = vector.load %arg8[%c0_19, %c0_20] : memref<4x16xf32, #tpu.memory_space<vmem>>, vector<4x16xf32>
    %cst_21 = arith.constant dense<0.000000e+00> : vector<4x128xf32>
    %34 = tpu.matmul %33, %32, %cst_21 {dimension_numbers = #tpu.dot_dimension_numbers<[1], [0], [0], [1], [0, 0, 1, 1], [], []>} : vector<4x16xf32>, vector<16x128xf32>, vector<4x128xf32> -> vector<4x128xf32>
    %c0_22 = arith.constant 0 : index
    %c0_23 = arith.constant 0 : index
    %35 = vector.load %arg9[%c0_22, %c0_23] : memref<4x1xf32, #tpu.memory_space<vmem>>, vector<4x1xf32>
    %36 = vector.broadcast %35 : vector<4x1xf32> to vector<4x128xf32>
    %37 = arith.addf %34, %36 : vector<4x128xf32>
    %c0_24 = arith.constant 0 : index
    %c0_25 = arith.constant 0 : index
    %38 = vector.load %arg10[%c0_24, %c0_25] : memref<4x128xf32, #tpu.memory_space<vmem>>, vector<4x128xf32>
    tpu.vector_store %arg10[%c0_24, %c0_25], %37 {strides = array<i32>} : memref<4x128xf32, #tpu.memory_space<vmem>>, vector<4x128xf32>,
    return
  }
  func.func @transform_0(%arg0: i32) -> (i32, i32) {
    %c0_i32 = arith.constant 0 : i32
    %c0_i32_0 = arith.constant 0 : i32
    return %c0_i32, %arg0 : i32, i32
  }
  func.func @transform_1(%arg0: i32) -> (i32, i32) {
    %c0_i32 = arith.constant 0 : i32
    %c0_i32_0 = arith.constant 0 : i32
    %c0_i32_1 = arith.constant 0 : i32
    return %c0_i32, %c0_i32_0 : i32, i32
  }
  func.func @transform_2(%arg0: i32) -> (i32, i32) {
    %c0_i32 = arith.constant 0 : i32
    %c0_i32_0 = arith.constant 0 : i32
    %c0_i32_1 = arith.constant 0 : i32
    return %c0_i32, %c0_i32_0 : i32, i32
  }
  func.func @transform_3(%arg0: i32) -> (i32, i32) {
    %c0_i32 = arith.constant 0 : i32
    %c0_i32_0 = arith.constant 0 : i32
    %c0_i32_1 = arith.constant 0 : i32
    return %c0_i32, %c0_i32_0 : i32, i32
  }
  func.func @transform_4(%arg0: i32) -> (i32, i32) {
    %c0_i32 = arith.constant 0 : i32
    %c0_i32_0 = arith.constant 0 : i32
    %c0_i32_1 = arith.constant 0 : i32
    return %c0_i32, %c0_i32_0 : i32, i32
  }
  func.func @transform_5(%arg0: i32) -> (i32, i32) {
    %c0_i32 = arith.constant 0 : i32
    %c0_i32_0 = arith.constant 0 : i32
    %c0_i32_1 = arith.constant 0 : i32
    return %c0_i32, %c0_i32_0 : i32, i32
  }
  func.func @transform_6(%arg0: i32) -> (i32, i32) {
    %c0_i32 = arith.constant 0 : i32
    %c0_i32_0 = arith.constant 0 : i32
    %c0_i32_1 = arith.constant 0 : i32
    return %c0_i32, %c0_i32_0 : i32, i32
  }
  func.func @transform_7(%arg0: i32) -> (i32, i32) {
    %c0_i32 = arith.constant 0 : i32
    %c0_i32_0 = arith.constant 0 : i32
    %c0_i32_1 = arith.constant 0 : i32
    return %c0_i32, %c0_i32_0 : i32, i32
  }
  func.func @transform_8(%arg0: i32) -> (i32, i32) {
    %c0_i32 = arith.constant 0 : i32
    %c0_i32_0 = arith.constant 0 : i32
    %c0_i32_1 = arith.constant 0 : i32
    return %c0_i32, %c0_i32_0 : i32, i32
  }
  func.func @transform_9(%arg0: i32) -> (i32, i32) {
    %c0_i32 = arith.constant 0 : i32
    %c0_i32_0 = arith.constant 0 : i32
    return %c0_i32, %arg0 : i32, i32
  }
}

</mosaic_0001>

<llo_original>
// kernel: pinn_forward_lanes.1
$region0: #{pinn_forward_lanes.1}
  #allocation0 [shape = 'u32[]', space=smem, size = 0x4, offset = 0x4, fixed_abs, tag = 'smem constant byte address 0x4 - core index']
  #allocation1 [shape = 'u32[144,128]{1,0:T(1,128)}', space=vmem, size = 0x12000, scoped, tag = 'internal scratch']
  %s0 = inlined_call_operand.vmem [shape: f32[4,128], index: 0, kind: input, shape index: {}]
  %s1 = inlined_call_operand.vmem [shape: f32[32,4], index: 1, kind: input, shape index: {}]
  %s2 = inlined_call_operand.vmem [shape: f32[32,1], index: 2, kind: input, shape index: {}]
  %s3 = inlined_call_operand.vmem [shape: f32[32,32], index: 3, kind: input, shape index: {}]
  %s4 = inlined_call_operand.vmem [shape: f32[32,1], index: 4, kind: input, shape index: {}]
  %s5 = inlined_call_operand.vmem [shape: f32[16,32], index: 5, kind: input, shape index: {}]
  %s6 = inlined_call_operand.vmem [shape: f32[16,1], index: 6, kind: input, shape index: {}]
  %s7 = inlined_call_operand.vmem [shape: f32[4,16], index: 7, kind: input, shape index: {}]
  %s8 = inlined_call_operand.vmem [shape: f32[4,1], index: 8, kind: input, shape index: {}]
  %s9 = inlined_call_operand.hbm [shape: f32[4,128], index: 9, kind: output, shape index: {}]
  %s10 = sld [smem:[#allocation0]]
  $region46: #{pinn_forward_lanes.1} parent=0
    _
  %s12 = ssub.s32 1, %s10
  %s13 = scalar_select 0, %s12, %s10
  $region1: #{pinn_forward_lanes.1} parent=0
    #allocation2 [shape = 'u8[2048]{0}', space=vmem, size = 0x800, scoped, tag = 'output window, operand 0, single buffered']
    #allocation3 [shape = 's32[1]{0}', space=sflag, size = 0x4, scoped, tag = 'scoped memory for pinn_forward_lanes.1']
    %14 = vsyncpa [#allocation3], 0
    // Predicated region
    $region2: #{pinn_forward_lanes.1} parent=1 // pred_check
      _
    $region3: #{pinn_forward_lanes.1} parent=1 // pred_check_branch
      %16 = sbr.rel (0) target = $region5
    $region4: #{pinn_forward_lanes.1} parent=1 // pred_region
      _
    $region5: #{pinn_forward_lanes.1} parent=1 // pred_fallthru
      _
    // Predicated region
    $region6: #{pinn_forward_lanes.1} parent=1 // pred_check
      _
    $region7: #{pinn_forward_lanes.1} parent=1 // pred_check_branch
      %18 = sbr.rel (0) target = $region9
    $region8: #{pinn_forward_lanes.1} parent=1 // pred_region
      _
    $region9: #{pinn_forward_lanes.1} parent=1 // pred_fallthru
      _
    // Predicated region
    $region10: #{pinn_forward_lanes.1} parent=1 // pred_check
      _
    $region11: #{pinn_forward_lanes.1} parent=1 // pred_check_branch
      %20 = sbr.rel (0) target = $region13
    $region12: #{pinn_forward_lanes.1} parent=1 // pred_region
      _
    $region13: #{pinn_forward_lanes.1} parent=1 // pred_fallthru
      _
    // Predicated region
    $region14: #{pinn_forward_lanes.1} parent=1 // pred_check
      _
    $region15: #{pinn_forward_lanes.1} parent=1 // pred_check_branch
      %22 = sbr.rel (0) target = $region17
    $region16: #{pinn_forward_lanes.1} parent=1 // pred_region
      _
    $region17: #{pinn_forward_lanes.1} parent=1 // pred_fallthru
      _
    // Predicated region
    $region18: #{pinn_forward_lanes.1} parent=1 // pred_check
      _
    $region19: #{pinn_forward_lanes.1} parent=1 // pred_check_branch
      %24 = sbr.rel (0) target = $region21
    $region20: #{pinn_forward_lanes.1} parent=1 // pred_region
      _
    $region21: #{pinn_forward_lanes.1} parent=1 // pred_fallthru
      _
    // Predicated region
    $region22: #{pinn_forward_lanes.1} parent=1 // pred_check
      _
    $region23: #{pinn_forward_lanes.1} parent=1 // pred_check_branch
      %26 = sbr.rel (0) target = $region25
    $region24: #{pinn_forward_lanes.1} parent=1 // pred_region
      _
    $region25: #{pinn_forward_lanes.1} parent=1 // pred_fallthru
      _
    // Predicated region
    $region26: #{pinn_forward_lanes.1} parent=1 // pred_check
      _
    $region27: #{pinn_forward_lanes.1} parent=1 // pred_check_branch
      %28 = sbr.rel (0) target = $region29
    $region28: #{pinn_forward_lanes.1} parent=1 // pred_region
      _
    $region29: #{pinn_forward_lanes.1} parent=1 // pred_fallthru
      _
    // Predicated region
    $region30: #{pinn_forward_lanes.1} parent=1 // pred_check
      _
    $region31: #{pinn_forward_lanes.1} parent=1 // pred_check_branch
      %30 = sbr.rel (0) target = $region33
    $region32: #{pinn_forward_lanes.1} parent=1 // pred_region
      _
    $region33: #{pinn_forward_lanes.1} parent=1 // pred_fallthru
      _
    // Predicated region
    $region34: #{pinn_forward_lanes.1} parent=1 // pred_check
      _
    $region35: #{pinn_forward_lanes.1} parent=1 // pred_check_branch
      %32 = sbr.rel (0) target = $region37
    $region36: #{pinn_forward_lanes.1} parent=1 // pred_region
      _
    $region37: #{pinn_forward_lanes.1} parent=1 // pred_fallthru
      _
    %v33 = vld [vmem:[%s0] sm:$0xf]
    %v34 = vld [vmem:[%s1] sm:$0xff]
    %v35 = vld [vmem:[%s1 + $0x8] sm:$0xff]
    %v36 = vld [vmem:[%s1 + $0x10] sm:$0xff]
    %v37 = vld [vmem:[%s1 + $0x18] sm:$0xff]
    %v38 = vld [vmem:[%s2] sm:$0xff]
    %v39 = vld [vmem:[%s2 + $0x8] sm:$0xff]
    %v40 = vld [vmem:[%s2 + $0x10] sm:$0xff]
    %v41 = vld [vmem:[%s2 + $0x18] sm:$0xff]
    %43 = vset.pattern.permute.xlu0 0
    %44 = vperm.xlu0 %43, %v38
    %v45 = vpop.permute.xlu0 %44
    %48 = vset.pattern.permute.xlu0 0
    %49 = vperm.xlu0 %48, %v39
    %v50 = vpop.permute.xlu0 %49
    %53 = vset.pattern.permute.xlu0 0
    %54 = vperm.xlu0 %53, %v40
    %v55 = vpop.permute.xlu0 %54
    %58 = vset.pattern.permute.xlu0 0
    %59 = vperm.xlu0 %58, %v41
    %v60 = vpop.permute.xlu0 %59
    %vm62 = vcmask 31744
    %v64 = vsel %vm62, %v34, 0
    %v67 = vsel %vm62, %v35, 0
    %v70 = vsel %vm62, %v36, 0
    %v73 = vsel %vm62, %v37, 0
    %vm75 = vcmask 1043456
    %v77 = vsel %vm75, %v33, 0
    %79 = vmatprep.subr.mxu0 0.0
    %80 = vmatpush1.msra.mxu0 %v77
    %81 = vmatprep.subr.mxu0 0.0
    %82 = vmatpush1.msra.mxu0 0.0
    %83 = vmatprep.subr.mxu0 0.0
    %84 = vmatpush1.msra.mxu0 0.0
    %85 = vmatprep.subr.mxu0 0.0
    %86 = vmatpush1.msra.mxu0 0.0
    %87 = vmatprep.subr.mxu0 0.0
    %88 = vmatpush1.msra.mxu0 0.0
    %89 = vmatprep.subr.mxu0 0.0
    %90 = vmatpush1.msra.mxu0 0.0
    %91 = vmatprep.subr.mxu0 0.0
    %92 = vmatpush1.msra.mxu0 0.0
    %93 = vmatprep.subr.mxu0 0.0
    %94 = vmatpush1.msra.mxu0 0.0
    %95 = vmatprep.subr.mxu0 0.0
    %96 = vmatpush1.msra.mxu0 0.0
    %97 = vmatprep.subr.mxu0 0.0
    %98 = vmatpush1.msra.mxu0 0.0
    %99 = vmatprep.subr.mxu0 0.0
    %100 = vmatpush1.msra.mxu0 0.0
    %101 = vmatprep.subr.mxu0 0.0
    %102 = vmatpush1.msra.mxu0 0.0
    %103 = vmatprep.subr.mxu0 0.0
    %104 = vmatpush1.msra.mxu0 0.0
    %105 = vmatprep.subr.mxu0 0.0
    %106 = vmatpush1.msra.mxu0 0.0
    %107 = vmatprep.subr.mxu0 0.0
    %108 = vmatpush1.msra.mxu0 0.0
    %109 = vmatprep.subr.mxu0 0.0
    %110 = vmatpush1.msra.mxu0 0.0
    %111 = vmatprep.subr.mxu0 0.0
    %112 = vmatpush1.msra.mxu0 0.0
    %113 = vmatprep.subr.mxu0 0.0
    %114 = vmatpush1.msra.mxu0 0.0
    %115 = vmatprep.subr.mxu0 0.0
    %116 = vmatpush1.msra.mxu0 0.0
    %117 = vmatprep.subr.mxu0 0.0
    %118 = vmatpush1.msra.mxu0 0.0
    %119 = vmatprep.subr.mxu0 0.0
    %120 = vmatpush1.msra.mxu0 0.0
    %121 = vmatprep.subr.mxu0 0.0
    %122 = vmatpush1.msra.mxu0 0.0
    %123 = vmatprep.subr.mxu0 0.0
    %124 = vmatpush1.msra.mxu0 0.0
    %125 = vmatprep.subr.mxu0 0.0
    %126 = vmatpush1.msra.mxu0 0.0
    %127 = vmatprep.subr.mxu0 0.0
    %128 = vmatpush1.msra.mxu0 0.0
    %129 = vmatprep.subr.mxu0 0.0
    %130 = vmatpush1.msra.mxu0 0.0
    %131 = vmatprep.subr.mxu0 0.0
    %132 = vmatpush1.msra.mxu0 0.0
    %133 = vmatprep.subr.mxu0 0.0
    %134 = vmatpush1.msra.mxu0 0.0
    %135 = vmatprep.subr.mxu0 0.0
    %136 = vmatpush1.msra.mxu0 0.0
    %137 = vmatprep.subr.mxu0 0.0
    %138 = vmatpush1.msra.mxu0 0.0
    %139 = vmatprep.subr.mxu0 0.0
    %140 = vmatpush1.msra.mxu0 0.0
    %141 = vmatprep.subr.mxu0 0.0
    %142 = vmatpush1.msra.mxu0 0.0
    %143 = vmatprep.mubr.f32.mxu0 0.0
    %144 = vmatmul.mubr.f32.gmra.mrb[0].mxu0 %v64
    %v145 = vpop.f32.mrb[0].mxu0
    %v146 = vadd.f32 %v45, %v145
    %v147 = vpop.f32.mrb[0].mxu0
    %148 = vmatprep.mubr.f32.mxu0 0.0
    %149 = vmatmul.mubr.f32.gmra.mrb[0].mxu0 %v67
    %v150 = vpop.f32.mrb[0].mxu0
    %v151 = vadd.f32 %v50, %v150
    %v152 = vpop.f32.mrb[0].mxu0
    %153 = vmatprep.mubr.f32.mxu0 0.0
    %154 = vmatmul.mubr.f32.gmra.mrb[0].mxu0 %v70
    %v155 = vpop.f32.mrb[0].mxu0
    %v156 = vadd.f32 %v55, %v155
    %v157 = vpop.f32.mrb[0].mxu0
    %158 = vmatprep.mubr.f32.mxu0 0.0
    %159 = vmatmul.mubr.f32.gmra.mrb[0].mxu0 %v73
    %v160 = vpop.f32.mrb[0].mxu0
    %v161 = vadd.f32 %v60, %v160
    %v162 = vpop.f32.mrb[0].mxu0
    %163 = vdwg.mxu0
    %v164 = vtanh.pop %v146
    %v165 = vtanh.pop %v151
    %v166 = vtanh.pop %v156
    %v167 = vtanh.pop %v161
    %v168 = vld [vmem:[%s3] sm:$0xff]
    %v169 = vld [vmem:[%s3 + $0x8] sm:$0xff]
    %v170 = vld [vmem:[%s3 + $0x10] sm:$0xff]
    %v171 = vld [vmem:[%s3 + $0x18] sm:$0xff]
    %v172 = vld [vmem:[%s4] sm:$0xff]
    %v173 = vld [vmem:[%s4 + $0x8] sm:$0xff]
    %v174 = vld [vmem:[%s4 + $0x10] sm:$0xff]
    %v175 = vld [vmem:[%s4 + $0x18] sm:$0xff]
    %177 = vset.pattern.permute.xlu0 0
    %178 = vperm.xlu0 %177, %v172
    %v179 = vpop.permute.xlu0 %178
    %182 = vset.pattern.permute.xlu0 0
    %183 = vperm.xlu0 %182, %v173
    %v184 = vpop.permute.xlu0 %183
    %187 = vset.pattern.permute.xlu0 0
    %188 = vperm.xlu0 %187, %v174
    %v189 = vpop.permute.xlu0 %188
    %192 = vset.pattern.permute.xlu0 0
    %193 = vperm.xlu0 %192, %v175
    %v194 = vpop.permute.xlu0 %193
    %vm196 = vcmask 261120
    %v198 = vsel %vm196, %v168, 0
    %v201 = vsel %vm196, %v169, 0
    %v204 = vsel %vm196, %v170, 0
    %v207 = vsel %vm196, %v171, 0
    %209 = vmatprep.subr.mxu0 0.0
    %210 = vmatpush1.msra.mxu0 %v164
    %211 = vmatprep.subr.mxu0 0.0
    %212 = vmatpush1.msra.mxu0 %v165
    %213 = vmatprep.subr.mxu0 0.0
    %214 = vmatpush1.msra.mxu0 %v166
    %215 = vmatprep.subr.mxu0 0.0
    %216 = vmatpush1.msra.mxu0 %v167
    %217 = vmatprep.subr.mxu0 0.0
    %218 = vmatpush1.msra.mxu0 0.0
    %219 = vmatprep.subr.mxu0 0.0
    %220 = vmatpush1.msra.mxu0 0.0
    %221 = vmatprep.subr.mxu0 0.0
    %222 = vmatpush1.msra.mxu0 0.0
    %223 = vmatprep.subr.mxu0 0.0
    %224 = vmatpush1.msra.mxu0 0.0
    %225 = vmatprep.subr.mxu0 0.0
    %226 = vmatpush1.msra.mxu0 0.0
    %227 = vmatprep.subr.mxu0 0.0
    %228 = vmatpush1.msra.mxu0 0.0
    %229 = vmatprep.subr.mxu0 0.0
    %230 = vmatpush1.msra.mxu0 0.0
    %231 = vmatprep.subr.mxu0 0.0
    %232 = vmatpush1.msra.mxu0 0.0
    %233 = vmatprep.subr.mxu0 0.0
    %234 = vmatpush1.msra.mxu0 0.0
    %235 = vmatprep.subr.mxu0 0.0
    %236 = vmatpush1.msra.mxu0 0.0
    %237 = vmatprep.subr.mxu0 0.0
    %238 = vmatpush1.msra.mxu0 0.0
    %239 = vmatprep.subr.mxu0 0.0
    %240 = vmatpush1.msra.mxu0 0.0
    %241 = vmatprep.subr.mxu0 0.0
    %242 = vmatpush1.msra.mxu0 0.0
    %243 = vmatprep.subr.mxu0 0.0
    %244 = vmatpush1.msra.mxu0 0.0
    %245 = vmatprep.subr.mxu0 0.0
    %246 = vmatpush1.msra.mxu0 0.0
    %247 = vmatprep.subr.mxu0 0.0
    %248 = vmatpush1.msra.mxu0 0.0
    %249 = vmatprep.subr.mxu0 0.0
    %250 = vmatpush1.msra.mxu0 0.0
    %251 = vmatprep.subr.mxu0 0.0
    %252 = vmatpush1.msra.mxu0 0.0
    %253 = vmatprep.subr.mxu0 0.0
    %254 = vmatpush1.msra.mxu0 0.0
    %255 = vmatprep.subr.mxu0 0.0
    %256 = vmatpush1.msra.mxu0 0.0
    %257 = vmatprep.subr.mxu0 0.0
    %258 = vmatpush1.msra.mxu0 0.0
    %259 = vmatprep.subr.mxu0 0.0
    %260 = vmatpush1.msra.mxu0 0.0
    %261 = vmatprep.subr.mxu0 0.0
    %262 = vmatpush1.msra.mxu0 0.0
    %263 = vmatprep.subr.mxu0 0.0
    %264 = vmatpush1.msra.mxu0 0.0
    %265 = vmatprep.subr.mxu0 0.0
    %266 = vmatpush1.msra.mxu0 0.0
    %267 = vmatprep.subr.mxu0 0.0
    %268 = vmatpush1.msra.mxu0 0.0
    %269 = vmatprep.subr.mxu0 0.0
    %270 = vmatpush1.msra.mxu0 0.0
    %271 = vmatprep.subr.mxu0 0.0
    %272 = vmatpush1.msra.mxu0 0.0
    %273 = vmatprep.mubr.f32.mxu0 0.0
    %274 = vmatmul.mubr.f32.gmra.mrb[0].mxu0 %v198
    %v275 = vpop.f32.mrb[0].mxu0
    %v276 = vadd.f32 %v179, %v275
    %v277 = vpop.f32.mrb[0].mxu0
    %278 = vmatprep.mubr.f32.mxu0 0.0
    %279 = vmatmul.mubr.f32.gmra.mrb[0].mxu0 %v201
    %v280 = vpop.f32.mrb[0].mxu0
    %v281 = vadd.f32 %v184, %v280
    %v282 = vpop.f32.mrb[0].mxu0
    %283 = vmatprep.mubr.f32.mxu0 0.0
    %284 = vmatmul.mubr.f32.gmra.mrb[0].mxu0 %v204
    %v285 = vpop.f32.mrb[0].mxu0
    %v286 = vadd.f32 %v189, %v285
    %v287 = vpop.f32.mrb[0].mxu0
    %288 = vmatprep.mubr.f32.mxu0 0.0
    %289 = vmatmul.mubr.f32.gmra.mrb[0].mxu0 %v207
    %v290 = vpop.f32.mrb[0].mxu0
    %v291 = vadd.f32 %v194, %v290
    %v292 = vpop.f32.mrb[0].mxu0
    %293 = vdwg.mxu0
    %v294 = vmax.f32 %v276, 0.0
    %v295 = vmax.f32 %v281, 0.0
    %v296 = vmax.f32 %v286, 0.0
    %v297 = vmax.f32 %v291, 0.0
    %v298 = vand.u32 2147483647, %v276
    %v299 = vand.u32 2147483647, %v281
    %v300 = vand.u32 2147483647, %v286
    %v301 = vand.u32 2147483647, %v291
    %v302 = vsub.f32 0.0, %v298
    %v303 = vsub.f32 0.0, %v299
    %v304 = vsub.f32 0.0, %v300
    %v305 = vsub.f32 0.0, %v301
    %v306 = vmul.f32 %v302, 1.442695
    %v307 = vpow.pop %v306
    %v308 = vmul.f32 %v303, 1.442695
    %v309 = vpow.pop %v308
    %v310 = vmul.f32 %v304, 1.442695
    %v311 = vpow.pop %v310
    %v312 = vmul.f32 %v305, 1.442695
    %v313 = vpow.pop %v312
    %v314 = vadd.f32 %v307, 1.0
    %v315 = vlog2.pop %v314
    %v316 = vmul.f32 %v315, 0.6931472
    %v317 = vmul.f32 -0.5, %v307
    %v318 = vadd.f32 %v317, 1.0
    %v319 = vmul.f32 %v318, %v307
    %v320 = vand.u32 2147483647, %v307
    %vm321 = vcmp.lt.f32.partialorder %v320, 0.0004427343
    %v322 = vsel %vm321, %v319, %v316
    %v323 = vadd.f32 %v309, 1.0
    %v324 = vlog2.pop %v323
    %v325 = vmul.f32 %v324, 0.6931472
    %v326 = vmul.f32 -0.5, %v309
    %v327 = vadd.f32 %v326, 1.0
    %v328 = vmul.f32 %v327, %v309
    %v329 = vand.u32 2147483647, %v309
    %vm330 = vcmp.lt.f32.partialorder %v329, 0.0004427343
    %v331 = vsel %vm330, %v328, %v325
    %v332 = vadd.f32 %v311, 1.0
    %v333 = vlog2.pop %v332
    %v334 = vmul.f32 %v333, 0.6931472
    %v335 = vmul.f32 -0.5, %v311
    %v336 = vadd.f32 %v335, 1.0
    %v337 = vmul.f32 %v336, %v311
    %v338 = vand.u32 2147483647, %v311
    %vm339 = vcmp.lt.f32.partialorder %v338, 0.0004427343
    %v340 = vsel %vm339, %v337, %v334
    %v341 = vadd.f32 %v313, 1.0
    %v342 = vlog2.pop %v341
    %v343 = vmul.f32 %v342, 0.6931472
    %v344 = vmul.f32 -0.5, %v313
    %v345 = vadd.f32 %v344, 1.0
    %v346 = vmul.f32 %v345, %v313
    %v347 = vand.u32 2147483647, %v313
    %vm348 = vcmp.lt.f32.partialorder %v347, 0.0004427343
    %v349 = vsel %vm348, %v346, %v343
    %v350 = vadd.f32 %v294, %v322
    %v351 = vadd.f32 %v295, %v331
    %v352 = vadd.f32 %v296, %v340
    %v353 = vadd.f32 %v297, %v349
    %v354 = vld [vmem:[%s5] sm:$0xff]
    %v355 = vld [vmem:[%s5 + $0x8] sm:$0xff]
    %v356 = vld [vmem:[%s6] sm:$0xff]
    %v357 = vld [vmem:[%s6 + $0x8] sm:$0xff]
    %359 = vset.pattern.permute.xlu0 0
    %360 = vperm.xlu0 %359, %v356
    %v361 = vpop.permute.xlu0 %360
    %364 = vset.pattern.permute.xlu0 0
    %365 = vperm.xlu0 %364, %v357
    %v366 = vpop.permute.xlu0 %365
    %v369 = vsel %vm196, %v354, 0
    %v372 = vsel %vm196, %v355, 0
    %374 = vmatprep.subr.mxu0 0.0
    %375 = vmatpush1.msra.mxu0 %v350
    %376 = vmatprep.subr.mxu0 0.0
    %377 = vmatpush1.msra.mxu0 %v351
    %378 = vmatprep.subr.mxu0 0.0
    %379 = vmatpush1.msra.mxu0 %v352
    %380 = vmatprep.subr.mxu0 0.0
    %381 = vmatpush1.msra.mxu0 %v353
    %382 = vmatprep.subr.mxu0 0.0
    %383 = vmatpush1.msra.mxu0 0.0
    %384 = vmatprep.subr.mxu0 0.0
    %385 = vmatpush1.msra.mxu0 0.0
    %386 = vmatprep.subr.mxu0 0.0
    %387 = vmatpush1.msra.mxu0 0.0
    %388 = vmatprep.subr.mxu0 0.0
    %389 = vmatpush1.msra.mxu0 0.0
    %390 = vmatprep.subr.mxu0 0.0
    %391 = vmatpush1.msra.mxu0 0.0
    %392 = vmatprep.subr.mxu0 0.0
    %393 = vmatpush1.msra.mxu0 0.0
    %394 = vmatprep.subr.mxu0 0.0
    %395 = vmatpush1.msra.mxu0 0.0
    %396 = vmatprep.subr.mxu0 0.0
    %397 = vmatpush1.msra.mxu0 0.0
    %398 = vmatprep.subr.mxu0 0.0
    %399 = vmatpush1.msra.mxu0 0.0
    %400 = vmatprep.subr.mxu0 0.0
    %401 = vmatpush1.msra.mxu0 0.0
    %402 = vmatprep.subr.mxu0 0.0
    %403 = vmatpush1.msra.mxu0 0.0
    %404 = vmatprep.subr.mxu0 0.0
    %405 = vmatpush1.msra.mxu0 0.0
    %406 = vmatprep.subr.mxu0 0.0
    %407 = vmatpush1.msra.mxu0 0.0
    %408 = vmatprep.subr.mxu0 0.0
    %409 = vmatpush1.msra.mxu0 0.0
    %410 = vmatprep.subr.mxu0 0.0
    %411 = vmatpush1.msra.mxu0 0.0
    %412 = vmatprep.subr.mxu0 0.0
    %413 = vmatpush1.msra.mxu0 0.0
    %414 = vmatprep.subr.mxu0 0.0
    %415 = vmatpush1.msra.mxu0 0.0
    %416 = vmatprep.subr.mxu0 0.0
    %417 = vmatpush1.msra.mxu0 0.0
    %418 = vmatprep.subr.mxu0 0.0
    %419 = vmatpush1.msra.mxu0 0.0
    %420 = vmatprep.subr.mxu0 0.0
    %421 = vmatpush1.msra.mxu0 0.0
    %422 = vmatprep.subr.mxu0 0.0
    %423 = vmatpush1.msra.mxu0 0.0
    %424 = vmatprep.subr.mxu0 0.0
    %425 = vmatpush1.msra.mxu0 0.0
    %426 = vmatprep.subr.mxu0 0.0
    %427 = vmatpush1.msra.mxu0 0.0
    %428 = vmatprep.subr.mxu0 0.0
    %429 = vmatpush1.msra.mxu0 0.0
    %430 = vmatprep.subr.mxu0 0.0
    %431 = vmatpush1.msra.mxu0 0.0
    %432 = vmatprep.subr.mxu0 0.0
    %433 = vmatpush1.msra.mxu0 0.0
    %434 = vmatprep.subr.mxu0 0.0
    %435 = vmatpush1.msra.mxu0 0.0
    %436 = vmatprep.subr.mxu0 0.0
    %437 = vmatpush1.msra.mxu0 0.0
    %438 = vmatprep.mubr.f32.mxu0 0.0
    %439 = vmatmul.mubr.f32.gmra.mrb[0].mxu0 %v369
    %v440 = vpop.f32.mrb[0].mxu0
    %v441 = vadd.f32 %v361, %v440
    %v442 = vpop.f32.mrb[0].mxu0
    %443 = vmatprep.mubr.f32.mxu0 0.0
    %444 = vmatmul.mubr.f32.gmra.mrb[0].mxu0 %v372
    %v445 = vpop.f32.mrb[0].mxu0
    %v446 = vadd.f32 %v366, %v445
    %v447 = vpop.f32.mrb[0].mxu0
    %448 = vdwg.mxu0
    %v449 = vmax.f32 %v441, 0.0
    %v450 = vmax.f32 %v446, 0.0
    %v451 = vand.u32 2147483647, %v441
    %v452 = vand.u32 2147483647, %v446
    %v453 = vsub.f32 0.0, %v451
    %v454 = vsub.f32 0.0, %v452
    %v455 = vmul.f32 %v453, 1.442695
    %v456 = vpow.pop %v455
    %v457 = vmul.f32 %v454, 1.442695
    %v458 = vpow.pop %v457
    %v459 = vadd.f32 %v456, 1.0
    %v460 = vlog2.pop %v459
    %v461 = vmul.f32 %v460, 0.6931472
    %v462 = vmul.f32 -0.5, %v456
    %v463 = vadd.f32 %v462, 1.0
    %v464 = vmul.f32 %v463, %v456
    %v465 = vand.u32 2147483647, %v456
    %vm466 = vcmp.lt.f32.partialorder %v465, 0.0004427343
    %v467 = vsel %vm466, %v464, %v461
    %v468 = vadd.f32 %v458, 1.0
    %v469 = vlog2.pop %v468
    %v470 = vmul.f32 %v469, 0.6931472
    %v471 = vmul.f32 -0.5, %v458
    %v472 = vadd.f32 %v471, 1.0
    %v473 = vmul.f32 %v472, %v458
    %v474 = vand.u32 2147483647, %v458
    %vm475 = vcmp.lt.f32.partialorder %v474, 0.0004427343
    %v476 = vsel %vm475, %v473, %v470
    %v477 = vadd.f32 %v449, %v467
    %v478 = vadd.f32 %v450, %v476
    %v479 = vld [vmem:[%s7] sm:$0xf]
    %v480 = vld [vmem:[%s8] sm:$0xf]
    %482 = vset.pattern.permute.xlu0 0
    %483 = vperm.xlu0 %482, %v480
    %v484 = vpop.permute.xlu0 %483
    %vm486 = vcmask 130048
    %v488 = vsel %vm486, %v479, 0
    %490 = vmatprep.subr.mxu0 0.0
    %491 = vmatpush1.msra.mxu0 %v477
    %492 = vmatprep.subr.mxu0 0.0
    %493 = vmatpush1.msra.mxu0 %v478
    %494 = vmatprep.subr.mxu0 0.0
    %495 = vmatpush1.msra.mxu0 0.0
    %496 = vmatprep.subr.mxu0 0.0
    %497 = vmatpush1.msra.mxu0 0.0
    %498 = vmatprep.subr.mxu0 0.0
    %499 = vmatpush1.msra.mxu0 0.0
    %500 = vmatprep.subr.mxu0 0.0
    %501 = vmatpush1.msra.mxu0 0.0
    %502 = vmatprep.subr.mxu0 0.0
    %503 = vmatpush1.msra.mxu0 0.0
    %504 = vmatprep.subr.mxu0 0.0
    %505 = vmatpush1.msra.mxu0 0.0
    %506 = vmatprep.subr.mxu0 0.0
    %507 = vmatpush1.msra.mxu0 0.0
    %508 = vmatprep.subr.mxu0 0.0
    %509 = vmatpush1.msra.mxu0 0.0
    %510 = vmatprep.subr.mxu0 0.0
    %511 = vmatpush1.msra.mxu0 0.0
    %512 = vmatprep.subr.mxu0 0.0
    %513 = vmatpush1.msra.mxu0 0.0
    %514 = vmatprep.subr.mxu0 0.0
    %515 = vmatpush1.msra.mxu0 0.0
    %516 = vmatprep.subr.mxu0 0.0
    %517 = vmatpush1.msra.mxu0 0.0
    %518 = vmatprep.subr.mxu0 0.0
    %519 = vmatpush1.msra.mxu0 0.0
    %520 = vmatprep.subr.mxu0 0.0
    %521 = vmatpush1.msra.mxu0 0.0
    %522 = vmatprep.subr.mxu0 0.0
    %523 = vmatpush1.msra.mxu0 0.0
    %524 = vmatprep.subr.mxu0 0.0
    %525 = vmatpush1.msra.mxu0 0.0
    %526 = vmatprep.subr.mxu0 0.0
    %527 = vmatpush1.msra.mxu0 0.0
    %528 = vmatprep.subr.mxu0 0.0
    %529 = vmatpush1.msra.mxu0 0.0
    %530 = vmatprep.subr.mxu0 0.0
    %531 = vmatpush1.msra.mxu0 0.0
    %532 = vmatprep.subr.mxu0 0.0
    %533 = vmatpush1.msra.mxu0 0.0
    %534 = vmatprep.subr.mxu0 0.0
    %535 = vmatpush1.msra.mxu0 0.0
    %536 = vmatprep.subr.mxu0 0.0
    %537 = vmatpush1.msra.mxu0 0.0
    %538 = vmatprep.subr.mxu0 0.0
    %539 = vmatpush1.msra.mxu0 0.0
    %540 = vmatprep.subr.mxu0 0.0
    %541 = vmatpush1.msra.mxu0 0.0
    %542 = vmatprep.subr.mxu0 0.0
    %543 = vmatpush1.msra.mxu0 0.0
    %544 = vmatprep.subr.mxu0 0.0
    %545 = vmatpush1.msra.mxu0 0.0
    %546 = vmatprep.subr.mxu0 0.0
    %547 = vmatpush1.msra.mxu0 0.0
    %548 = vmatprep.subr.mxu0 0.0
    %549 = vmatpush1.msra.mxu0 0.0
    %550 = vmatprep.subr.mxu0 0.0
    %551 = vmatpush1.msra.mxu0 0.0
    %552 = vmatprep.subr.mxu0 0.0
    %553 = vmatpush1.msra.mxu0 0.0
    %554 = vmatprep.mubr.f32.mxu0 0.0
    %555 = vmatmul.mubr.f32.gmra.mrb[0].mxu0 %v488
    %v556 = vpop.f32.mrb[0].mxu0
    %v557 = vadd.f32 %v484, %v556
    %v558 = vpop.f32.mrb[0].mxu0
    %559 = vdwg.mxu0
    %560 = vst [vmem:[#allocation2] sm:$0xf] %v557
    // Predicated region
    $region38: #{pinn_forward_lanes.1} parent=1 // pred_check
      _
    $region39: #{pinn_forward_lanes.1} parent=1 // pred_check_branch
      %562 = sbr.rel (0) target = $region41
    $region40: #{pinn_forward_lanes.1} parent=1 // pred_region
      %s564 = ssub.s32 64, 64
      %565 = vsyncadd [#allocation3], %s564
      %s567 = sshll.u32 [#allocation2], 4
      %s568 = int_to_ptr.vmem [resolvable:$true] %s567
      %570 = dma.vmem_to_hbm [thread:$0]  %s568, 64, %s9, [#allocation3]
    $region41: #{pinn_forward_lanes.1} parent=1 // pred_fallthru
      _
    // Predicated region
    $region42: #{pinn_forward_lanes.1} parent=1 // pred_check
      _
    $region43: #{pinn_forward_lanes.1} parent=1 // pred_check_branch
      %572 = sbr.rel (0) target = $region45
    $region44: #{pinn_forward_lanes.1} parent=1 // pred_region
      %573 = dma.done [#allocation3], 64
    $region45: #{pinn_forward_lanes.1} parent=1 // pred_fallthru
      _
    %574 = vsyncpa [#allocation3], 1

</llo_original>
